<compile_context>
chip_gen: v5e
topology: v5e:2x2
jax: 0.10.0
libtpu: 0.0.40
codegen_flags: <defaults>
</compile_context>

<pallas_src>
import jax
import jax.numpy as jnp
from jax.experimental import pallas as pl
from jax.experimental.pallas import tpu as pltpu

HID1 = 128
HID2 = 64
LANE = 128      # lane width: hidden dims padded to this for MXU / layout alignment
SUB = 8         # sublane granularity: output columns padded only to this
MAX_TB = 2048   # max batch rows per grid step
MIN_TB = 256    # only split into >=2 tiles once the batch has >= 2*MIN_TB rows


def _round_up(n: int, m: int) -> int:
    return ((n + m - 1) // m) * m


def dqn_kernel(x_ref, w1_ref, b1_ref, w2_ref, b2_ref, w3_ref, b3_ref, out_ref):
    """One batch tile of relu(fc1) -> relu(fc2) -> fc3, all in VMEM."""
    x = x_ref[...].astype(jnp.bfloat16)   # no-op if the caller already passes bf16

    # fc1 + relu (bf16 MXU inputs, f32 accumulate, f32 elementwise)
    h1 = jnp.dot(x, w1_ref[...], preferred_element_type=jnp.float32)
    h1 = jnp.maximum(h1 + b1_ref[...], 0.0)

    # fc2 + relu (HID2=64 padded to 128 lanes; padded columns are exactly zero)
    h2 = jnp.dot(h1.astype(jnp.bfloat16), w2_ref[...], preferred_element_type=jnp.float32)
    h2 = jnp.maximum(h2 + b2_ref[...], 0.0)

    # fc3: output padded only to 8 columns -> small HBM writeback
    y = jnp.dot(h2.astype(jnp.bfloat16), w3_ref[...], preferred_element_type=jnp.float32)
    out_ref[...] = (y + b3_ref[...]).astype(out_ref.dtype)


def _pad_cols(a, n):
    pad = n - a.shape[1]
    return jnp.pad(a, ((0, 0), (0, pad))) if pad > 0 else a


def _pad_rows(a, n):
    pad = n - a.shape[0]
    return jnp.pad(a, ((0, pad), (0, 0))) if pad > 0 else a


def prepare_params(params):
    """Pad hidden dims to 128 lanes, output dim only to 8; cast weights to bf16."""
    out_dim = params["w3"].shape[1]
    out_pad = _round_up(out_dim, SUB)                                           # 6 -> 8
    w1 = params["w1"].astype(jnp.bfloat16)                                      # (in, 128)
    b1 = params["b1"].astype(jnp.float32)                                       # (1, 128)
    w2 = _pad_cols(params["w2"], LANE).astype(jnp.bfloat16)                     # (128, 128)
    b2 = _pad_cols(params["b2"], LANE).astype(jnp.float32)                      # (1, 128)
    w3 = _pad_cols(_pad_rows(params["w3"], LANE), out_pad).astype(jnp.bfloat16) # (128, 8)
    b3 = _pad_cols(params["b3"], out_pad).astype(jnp.float32)                   # (1, 8)
    return {"w1": w1, "b1": b1, "w2": w2, "b2": b2, "w3": w3, "b3": b3}


def _choose_tiling(B: int):
    """Pick (tile_rows, padded_batch): big tiles, >=2 tiles when it matters, low tail waste."""
    b8 = _round_up(max(B, 1), 8)
    n_steps = pl.cdiv(b8, MAX_TB)
    if b8 >= 2 * MIN_TB:
        n_steps = max(n_steps, 2)      # keep both v7x TensorCores busy
    n_steps = max(n_steps, 1)
    tb = _round_up(pl.cdiv(b8, n_steps), 8)
    b_pad = _round_up(b8, tb)
    return tb, b_pad


def dqn_forward(x, padded_params, out_dim):
    """x: (B, input_dim) f32 or bf16. padded_params: output of prepare_params."""
    w1, b1 = padded_params["w1"], padded_params["b1"]
    w2, b2 = padded_params["w2"], padded_params["b2"]
    w3, b3 = padded_params["w3"], padded_params["b3"]
    out_pad = w3.shape[1]

    B, in_dim = x.shape
    tb, b_pad = _choose_tiling(B)
    if b_pad != B:
        x = jnp.pad(x, ((0, b_pad - B), (0, 0)))   # tail handled by zero-padded rows

    whole = lambda i: (0, 0)   # weights/biases: same block every step -> VMEM-resident
    resident = lambda a: pl.BlockSpec(a.shape, whole, pipeline_mode=pl.Buffered(1))

    weight_bytes = sum(int(a.size) * a.dtype.itemsize for a in (w1, b1, w2, b2, w3, b3))
    cost = pl.CostEstimate(
        flops=2 * b_pad * (in_dim * HID1 + HID1 * LANE + LANE * out_pad),
        transcendentals=0,
        bytes_accessed=b_pad * in_dim * x.dtype.itemsize
        + b_pad * out_pad * 4
        + weight_bytes,
    )

    out = pl.pallas_call(
        dqn_kernel,
        out_shape=jax.ShapeDtypeStruct((b_pad, out_pad), jnp.float32),
        grid=(b_pad // tb,),
        in_specs=[
            pl.BlockSpec((tb, in_dim), lambda i: (i, 0)),   # x: batch-tiled, pipelined DMA
            resident(w1), resident(b1),
            resident(w2), resident(b2),
            resident(w3), resident(b3),
        ],
        out_specs=pl.BlockSpec((tb, out_pad), lambda i: (i, 0)),
        compiler_params=pltpu.CompilerParams(
            dimension_semantics=("parallel",),   # batch tiles across v7x's 2 TCs
        ),
        cost_estimate=cost,
    )(x, w1, b1, w2, b2, w3, b3)

    return out[:B, :out_dim]


def init_params(key, input_dim, output_dim):
    """Deterministic synthetic params (Kaiming-uniform-ish like torch defaults)."""
    ks = jax.random.split(key, 6)

    def linear(kw, kb, fan_in, fan_out):
        bound = 1.0 / jnp.sqrt(jnp.float32(fan_in))
        w = jax.random.uniform(kw, (fan_in, fan_out), jnp.float32, -bound, bound)
        b = jax.random.uniform(kb, (1, fan_out), jnp.float32, -bound, bound)
        return w, b

    w1, b1 = linear(ks[0], ks[1], input_dim, HID1)
    w2, b2 = linear(ks[2], ks[3], HID1, HID2)
    w3, b3 = linear(ks[4], ks[5], HID2, output_dim)
    return {"w1": w1, "b1": b1, "w2": w2, "b2": b2, "w3": w3, "b3": b3}


def dqn_forward_ref_bf16(x, p):
    """Reference emulating the kernel's bf16-matmul / f32-accumulate math."""
    bf, f32 = jnp.bfloat16, jnp.float32
    h1 = jnp.maximum(jnp.dot(x.astype(bf), p["w1"].astype(bf),
                             preferred_element_type=f32) + p["b1"], 0.0)
    h2 = jnp.maximum(jnp.dot(h1.astype(bf), p["w2"].astype(bf),
                             preferred_element_type=f32) + p["b2"], 0.0)
    return jnp.dot(h2.astype(bf), p["w3"].astype(bf),
                   preferred_element_type=f32) + p["b3"]


def dqn_forward_ref_f32(x, p):
    h1 = jnp.maximum(x @ p["w1"] + p["b1"], 0.0)
    h2 = jnp.maximum(h1 @ p["w2"] + p["b2"], 0.0)
    return h2 @ p["w3"] + p["b3"]


if __name__ == "__main__":
    key = jax.random.PRNGKey(0)
    k_x, k_p, k_x2 = jax.random.split(key, 3)

    batch, input_dim, output_dim = 8, 32, 6
    x = jax.random.normal(k_x, (batch, input_dim), jnp.float32)
    params = init_params(k_p, input_dim, output_dim)
    padded = prepare_params(params)

    out = jax.block_until_ready(dqn_forward(x, padded, output_dim))
    assert out.shape == (batch, output_dim)

    # Check against a reference using the same bf16-input / f32-accum math.
    ref_bf16 = dqn_forward_ref_bf16(x, params)
    assert jnp.allclose(out, ref_bf16, atol=2e-3, rtol=2e-3), float(
        jnp.max(jnp.abs(out - ref_bf16)))

    # Loose sanity check against the pure-f32 PyTorch-equivalent math.
    ref_f32 = dqn_forward_ref_f32(x, params)
    assert jnp.allclose(out, ref_f32, atol=5e-2, rtol=5e-2), float(
        jnp.max(jnp.abs(out - ref_f32)))

    # Multi-tile grid path (>=2 parallel tiles) with a ragged batch size.
    b2 = 600
    x2 = jax.random.normal(k_x2, (b2, input_dim), jnp.float32)
    out2 = jax.block_until_ready(dqn_forward(x2, padded, output_dim))
    assert out2.shape == (b2, output_dim)
    ref2 = dqn_forward_ref_bf16(x2, params)
    assert jnp.allclose(out2, ref2, atol=2e-3, rtol=2e-3), float(
        jnp.max(jnp.abs(out2 - ref2)))

    # bf16 activations are accepted directly (no wrapper-side cast added).
    out_bf = jax.block_until_ready(dqn_forward(x.astype(jnp.bfloat16), padded, output_dim))
    assert out_bf.shape == (batch, output_dim)
    assert bool(jnp.all(jnp.isfinite(out_bf)))

    print("KERNEL_OK")
</pallas_src>

<mosaic_0001>
module attributes {stable_mosaic.version = 11 : i64} {
  func.func @dqn_kernel(%arg0: i32, %arg1: memref<8x32xf32, #tpu.memory_space<vmem>>, %arg2: memref<32x128xbf16, #tpu.memory_space<vmem>>, %arg3: memref<1x128xf32, #tpu.memory_space<vmem>>, %arg4: memref<128x128xbf16, #tpu.memory_space<vmem>>, %arg5: memref<1x128xf32, #tpu.memory_space<vmem>>, %arg6: memref<128x8xbf16, #tpu.memory_space<vmem>>, %arg7: memref<1x8xf32, #tpu.memory_space<vmem>>, %arg8: memref<8x8xf32, #tpu.memory_space<vmem>>) attributes {dimension_semantics = [#tpu.dimension_semantics<parallel>], iteration_bounds = array<i64: 1>, scalar_prefetch = 0 : i64, scratch_operands = 0 : i64, tpu.core_type = #tpu.core_type<tc>, window_params = [{transform_indices = @transform_0, window_bounds = array<i64: 8, 32>}, {pipeline_mode = #tpu.pipeline_mode<synchronous>, transform_indices = @transform_1, window_bounds = array<i64: 32, 128>}, {pipeline_mode = #tpu.pipeline_mode<synchronous>, transform_indices = @transform_2, window_bounds = array<i64: 1, 128>}, {pipeline_mode = #tpu.pipeline_mode<synchronous>, transform_indices = @transform_3, window_bounds = array<i64: 128, 128>}, {pipeline_mode = #tpu.pipeline_mode<synchronous>, transform_indices = @transform_4, window_bounds = array<i64: 1, 128>}, {pipeline_mode = #tpu.pipeline_mode<synchronous>, transform_indices = @transform_5, window_bounds = array<i64: 128, 8>}, {pipeline_mode = #tpu.pipeline_mode<synchronous>, transform_indices = @transform_6, window_bounds = array<i64: 1, 8>}, {transform_indices = @transform_7, window_bounds = array<i64: 8, 8>}]} {
    %c0 = arith.constant 0 : index
    %c0_0 = arith.constant 0 : index
    %0 = vector.load %arg1[%c0, %c0_0] : memref<8x32xf32, #tpu.memory_space<vmem>>, vector<8x32xf32>
    %1 = arith.truncf %0 : vector<8x32xf32> to vector<8x32xbf16>
    %c0_1 = arith.constant 0 : index
    %c0_2 = arith.constant 0 : index
    %2 = vector.load %arg2[%c0_1, %c0_2] : memref<32x128xbf16, #tpu.memory_space<vmem>>, vector<32x128xbf16>
    %cst = arith.constant dense<0.000000e+00> : vector<8x128xf32>
    %3 = tpu.matmul %1, %2, %cst {dimension_numbers = #tpu.dot_dimension_numbers<[1], [0], [0], [1], [0, 0, 1, 1], [], []>} : vector<8x32xbf16>, vector<32x128xbf16>, vector<8x128xf32> -> vector<8x128xf32>
    %c0_3 = arith.constant 0 : index
    %c0_4 = arith.constant 0 : index
    %4 = vector.load %arg3[%c0_3, %c0_4] : memref<1x128xf32, #tpu.memory_space<vmem>>, vector<1x128xf32>
    %5 = vector.broadcast %4 : vector<1x128xf32> to vector<8x128xf32>
    %6 = arith.addf %3, %5 : vector<8x128xf32>
    %cst_5 = arith.constant 0.000000e+00 : f32
    %7 = vector.broadcast %cst_5 : f32 to vector<8x128xf32>
    %8 = arith.maximumf %6, %7 : vector<8x128xf32>
    %9 = arith.truncf %8 : vector<8x128xf32> to vector<8x128xbf16>
    %c0_6 = arith.constant 0 : index
    %c0_7 = arith.constant 0 : index
    %10 = vector.load %arg4[%c0_6, %c0_7] : memref<128x128xbf16, #tpu.memory_space<vmem>>, vector<128x128xbf16>
    %cst_8 = arith.constant dense<0.000000e+00> : vector<8x128xf32>
    %11 = tpu.matmul %9, %10, %cst_8 {dimension_numbers = #tpu.dot_dimension_numbers<[1], [0], [0], [1], [0, 0, 1, 1], [], []>} : vector<8x128xbf16>, vector<128x128xbf16>, vector<8x128xf32> -> vector<8x128xf32>
    %c0_9 = arith.constant 0 : index
    %c0_10 = arith.constant 0 : index
    %12 = vector.load %arg5[%c0_9, %c0_10] : memref<1x128xf32, #tpu.memory_space<vmem>>, vector<1x128xf32>
    %13 = vector.broadcast %12 : vector<1x128xf32> to vector<8x128xf32>
    %14 = arith.addf %11, %13 : vector<8x128xf32>
    %cst_11 = arith.constant 0.000000e+00 : f32
    %15 = vector.broadcast %cst_11 : f32 to vector<8x128xf32>
    %16 = arith.maximumf %14, %15 : vector<8x128xf32>
    %17 = arith.truncf %16 : vector<8x128xf32> to vector<8x128xbf16>
    %c0_12 = arith.constant 0 : index
    %c0_13 = arith.constant 0 : index
    %18 = vector.load %arg6[%c0_12, %c0_13] : memref<128x8xbf16, #tpu.memory_space<vmem>>, vector<128x8xbf16>
    %cst_14 = arith.constant dense<0.000000e+00> : vector<8x8xf32>
    %19 = tpu.matmul %17, %18, %cst_14 {dimension_numbers = #tpu.dot_dimension_numbers<[1], [0], [0], [1], [0, 0, 1, 1], [], []>} : vector<8x128xbf16>, vector<128x8xbf16>, vector<8x8xf32> -> vector<8x8xf32>
    %c0_15 = arith.constant 0 : index
    %c0_16 = arith.constant 0 : index
    %20 = vector.load %arg7[%c0_15, %c0_16] : memref<1x8xf32, #tpu.memory_space<vmem>>, vector<1x8xf32>
    %21 = vector.broadcast %20 : vector<1x8xf32> to vector<8x8xf32>
    %22 = arith.addf %19, %21 : vector<8x8xf32>
    %c0_17 = arith.constant 0 : index
    %c0_18 = arith.constant 0 : index
    %23 = vector.load %arg8[%c0_17, %c0_18] : memref<8x8xf32, #tpu.memory_space<vmem>>, vector<8x8xf32>
    tpu.vector_store %arg8[%c0_17, %c0_18], %22 {strides = array<i32>} : memref<8x8xf32, #tpu.memory_space<vmem>>, vector<8x8xf32>,
    return
  }
  func.func @transform_0(%arg0: i32) -> (i32, i32) {
    %c0_i32 = arith.constant 0 : i32
    %c0_i32_0 = arith.constant 0 : i32
    return %arg0, %c0_i32 : i32, i32
  }
  func.func @transform_1(%arg0: i32) -> (i32, i32) {
    %c0_i32 = arith.constant 0 : i32
    %c0_i32_0 = arith.constant 0 : i32
    %c0_i32_1 = arith.constant 0 : i32
    return %c0_i32, %c0_i32_0 : i32, i32
  }
  func.func @transform_2(%arg0: i32) -> (i32, i32) {
    %c0_i32 = arith.constant 0 : i32
    %c0_i32_0 = arith.constant 0 : i32
    %c0_i32_1 = arith.constant 0 : i32
    return %c0_i32, %c0_i32_0 : i32, i32
  }
  func.func @transform_3(%arg0: i32) -> (i32, i32) {
    %c0_i32 = arith.constant 0 : i32
    %c0_i32_0 = arith.constant 0 : i32
    %c0_i32_1 = arith.constant 0 : i32
    return %c0_i32, %c0_i32_0 : i32, i32
  }
  func.func @transform_4(%arg0: i32) -> (i32, i32) {
    %c0_i32 = arith.constant 0 : i32
    %c0_i32_0 = arith.constant 0 : i32
    %c0_i32_1 = arith.constant 0 : i32
    return %c0_i32, %c0_i32_0 : i32, i32
  }
  func.func @transform_5(%arg0: i32) -> (i32, i32) {
    %c0_i32 = arith.constant 0 : i32
    %c0_i32_0 = arith.constant 0 : i32
    %c0_i32_1 = arith.constant 0 : i32
    return %c0_i32, %c0_i32_0 : i32, i32
  }
  func.func @transform_6(%arg0: i32) -> (i32, i32) {
    %c0_i32 = arith.constant 0 : i32
    %c0_i32_0 = arith.constant 0 : i32
    %c0_i32_1 = arith.constant 0 : i32
    return %c0_i32, %c0_i32_0 : i32, i32
  }
  func.func @transform_7(%arg0: i32) -> (i32, i32) {
    %c0_i32 = arith.constant 0 : i32
    %c0_i32_0 = arith.constant 0 : i32
    return %arg0, %c0_i32 : i32, i32
  }
}

</mosaic_0001>

<llo_original>
// kernel: tpu_custom_call.1
$region0: #{tpu_custom_call.1}
  #allocation0 [shape = 'u32[]', space=smem, size = 0x4, offset = 0x4, fixed_abs, tag = 'smem constant byte address 0x4 - core index']
  #allocation1 [shape = 'u32[72,128]{1,0:T(1,128)}', space=vmem, size = 0x9000, scoped, tag = 'internal scratch']
  %s0 = inlined_call_operand.hbm [shape: f32[8,32], index: 0, kind: input, shape index: {}]
  %s1 = inlined_call_operand.hbm [shape: bf16[32,128], index: 1, kind: input, shape index: {}]
  %s2 = inlined_call_operand.vmem [shape: f32[1,128], index: 2, kind: input, shape index: {}]
  %s3 = inlined_call_operand.vmem [shape: bf16[128,128], index: 3, kind: input, shape index: {}]
  %s4 = inlined_call_operand.vmem [shape: f32[1,128], index: 4, kind: input, shape index: {}]
  %s5 = inlined_call_operand.vmem [shape: bf16[128,8], index: 5, kind: input, shape index: {}]
  %s6 = inlined_call_operand.vmem [shape: f32[1,8], index: 6, kind: input, shape index: {}]
  %s7 = inlined_call_operand.hbm [shape: f32[8,8], index: 7, kind: output, shape index: {}]
  %s8 = sld [smem:[#allocation0]]
  $region46: #{tpu_custom_call.1} parent=0
    _
  %s10 = ssub.s32 1, %s8
  %s11 = scalar_select 0, %s10, %s8
  $region1: #{tpu_custom_call.1} parent=0
    #allocation2 [shape = 'u8[4096]{0}', space=vmem, size = 0x1000, scoped, tag = 'input window, operand 0, single buffered']
    #allocation3 [shape = 's32[1]{0}', space=sflag, size = 0x4, scoped, tag = 'scoped memory for tpu_custom_call.1']
    #allocation4 [shape = 's32[1]{0}', space=sflag, size = 0x4, scoped, tag = 'scoped memory for tpu_custom_call.1']
    #allocation5 [shape = 'u8[8192]{0}', space=vmem, size = 0x2000, scoped, tag = 'input window, operand 1, single buffered']
    #allocation6 [shape = 's32[1]{0}', space=sflag, size = 0x4, scoped, tag = 'scoped memory for tpu_custom_call.1']
    #allocation7 [shape = 'u8[4096]{0}', space=vmem, size = 0x1000, scoped, tag = 'output window, operand 0, single buffered']
    %12 = vsyncpa [#allocation3], 0
    %13 = vsyncpa [#allocation6], 0
    %14 = vsyncpa [#allocation4], 0
    // Predicated region
    $region2: #{tpu_custom_call.1} parent=1 // pred_check
      _
    $region3: #{tpu_custom_call.1} parent=1 // pred_check_branch
      %16 = sbr.rel (0) target = $region5
    $region4: #{tpu_custom_call.1} parent=1 // pred_region
      %18 = vsyncadd [#allocation3], 0
      %s20 = sshll.u32 %s0, 4
      %s21 = int_to_ptr.hbm [resolvable:$true] %s20
      %s22 = sshll.u32 [#allocation2], 4
      %s23 = int_to_ptr.vmem [resolvable:$true] %s22
      %25 = dma.hbm_to_vmem [thread:$0]  %s21, 128, %s23, [#allocation3]
    $region5: #{tpu_custom_call.1} parent=1 // pred_fallthru
      _
    // Predicated region
    $region6: #{tpu_custom_call.1} parent=1 // pred_check
      _
    $region7: #{tpu_custom_call.1} parent=1 // pred_check_branch
      %27 = sbr.rel (0) target = $region9
    $region8: #{tpu_custom_call.1} parent=1 // pred_region
      %29 = vsyncadd [#allocation6], 0
      %s30 = sshll.u32 %s1, 4
      %s31 = int_to_ptr.hbm [resolvable:$true] %s30
      %s32 = sshll.u32 [#allocation5], 4
      %s33 = int_to_ptr.vmem [resolvable:$true] %s32
      %38 = dma.hbm_to_vmem [thread:$0]  %s31, 256, %s33, [#allocation6], 64, 64, 4
    $region9: #{tpu_custom_call.1} parent=1 // pred_fallthru
      _
    // Predicated region
    $region10: #{tpu_custom_call.1} parent=1 // pred_check
      _
    $region11: #{tpu_custom_call.1} parent=1 // pred_check_branch
      %40 = sbr.rel (0) target = $region13
    $region12: #{tpu_custom_call.1} parent=1 // pred_region
      _
    $region13: #{tpu_custom_call.1} parent=1 // pred_fallthru
      _
    // Predicated region
    $region14: #{tpu_custom_call.1} parent=1 // pred_check
      _
    $region15: #{tpu_custom_call.1} parent=1 // pred_check_branch
      %42 = sbr.rel (0) target = $region17
    $region16: #{tpu_custom_call.1} parent=1 // pred_region
      _
    $region17: #{tpu_custom_call.1} parent=1 // pred_fallthru
      _
    // Predicated region
    $region18: #{tpu_custom_call.1} parent=1 // pred_check
      _
    $region19: #{tpu_custom_call.1} parent=1 // pred_check_branch
      %44 = sbr.rel (0) target = $region21
    $region20: #{tpu_custom_call.1} parent=1 // pred_region
      _
    $region21: #{tpu_custom_call.1} parent=1 // pred_fallthru
      _
    // Predicated region
    $region22: #{tpu_custom_call.1} parent=1 // pred_check
      _
    $region23: #{tpu_custom_call.1} parent=1 // pred_check_branch
      %46 = sbr.rel (0) target = $region25
    $region24: #{tpu_custom_call.1} parent=1 // pred_region
      _
    $region25: #{tpu_custom_call.1} parent=1 // pred_fallthru
      _
    // Predicated region
    $region26: #{tpu_custom_call.1} parent=1 // pred_check
      _
    $region27: #{tpu_custom_call.1} parent=1 // pred_check_branch
      %48 = sbr.rel (0) target = $region29
    $region28: #{tpu_custom_call.1} parent=1 // pred_region
      _
    $region29: #{tpu_custom_call.1} parent=1 // pred_fallthru
      _
    // Predicated region
    $region30: #{tpu_custom_call.1} parent=1 // pred_check
      _
    $region31: #{tpu_custom_call.1} parent=1 // pred_check_branch
      %50 = sbr.rel (0) target = $region33
    $region32: #{tpu_custom_call.1} parent=1 // pred_region
      %52 = dma.done [#allocation3], 128
    $region33: #{tpu_custom_call.1} parent=1 // pred_fallthru
      _
    // Predicated region
    $region34: #{tpu_custom_call.1} parent=1 // pred_check
      _
    $region35: #{tpu_custom_call.1} parent=1 // pred_check_branch
      %54 = sbr.rel (0) target = $region37
    $region36: #{tpu_custom_call.1} parent=1 // pred_region
      %56 = dma.done [#allocation6], 256
    $region37: #{tpu_custom_call.1} parent=1 // pred_fallthru
      _
    %v58 = vld [vmem:[#allocation2] sm:$0xff]
    %v59 = vpack.c.bf16 %v58, %v58
    %v60 = vld [vmem:[#allocation5] sm:$0xf]
    %v61 = vld [vmem:[#allocation5 + $0x4] sm:$0xf]
    %v62 = vld [vmem:[#allocation5 + $0x8] sm:$0xf]
    %v63 = vld [vmem:[#allocation5 + $0xc] sm:$0xf]
    %v64 = vld [vmem:[%s2] sm:$0x1]
    %v66 = vperm.slane %v64, 0
    %v72 = vunpack.c.l.b16 %v60
    %v73 = vunpack.c.l.b16 %v61
    %v74 = vunpack.c.l.b16 %v62
    %v75 = vunpack.c.l.b16 %v63
    %v76 = vpack.c.b16 %v73, %v72
    %v77 = vpack.c.b16 %v75, %v74
    %vm80 = vcmask 261120
    %v82 = vsel %vm80, %v59, 0
    %84 = vmatpush.bf16.msra.mxu0 0
    %85 = vmatpush.bf16.msra.mxu0 0
    %86 = vmatpush.bf16.msra.mxu0 0
    %87 = vmatpush.bf16.msra.mxu0 0
    %88 = vmatpush.bf16.msra.mxu0 0
    %89 = vmatpush.bf16.msra.mxu0 0
    %90 = vmatpush.bf16.msra.mxu0 %v77
    %91 = vmatpush.bf16.msra.mxu0 %v76
    %92 = vmatmul.bf16.gmra.mxu0 %v82
    %v93 = vpop.f32.mrf.mxu0
    %v94 = vadd.f32 %v66, %v93
    %v95 = vpop.f32.mrf.mxu0
    %96 = vdwg.mxu0
    %v97 = vmax.f32 %v94, 0.0
    %v98 = vpack.c.bf16 %v97, %v97
    %v99 = vld [vmem:[%s3] sm:$0xf]
    %v100 = vld [vmem:[%s3 + $0x4] sm:$0xf]
    %v101 = vld [vmem:[%s3 + $0x8] sm:$0xf]
    %v102 = vld [vmem:[%s3 + $0xc] sm:$0xf]
    %v103 = vld [vmem:[%s3 + $0x10] sm:$0xf]
    %v104 = vld [vmem:[%s3 + $0x14] sm:$0xf]
    %v105 = vld [vmem:[%s3 + $0x18] sm:$0xf]
    %v106 = vld [vmem:[%s3 + $0x1c] sm:$0xf]
    %v107 = vld [vmem:[%s3 + $0x20] sm:$0xf]
    %v108 = vld [vmem:[%s3 + $0x24] sm:$0xf]
    %v109 = vld [vmem:[%s3 + $0x28] sm:$0xf]
    %v110 = vld [vmem:[%s3 + $0x2c] sm:$0xf]
    %v111 = vld [vmem:[%s3 + $0x30] sm:$0xf]
    %v112 = vld [vmem:[%s3 + $0x34] sm:$0xf]
    %v113 = vld [vmem:[%s3 + $0x38] sm:$0xf]
    %v114 = vld [vmem:[%s3 + $0x3c] sm:$0xf]
    %v115 = vld [vmem:[%s4] sm:$0x1]
    %v117 = vperm.slane %v115, 0
    %v135 = vunpack.c.l.b16 %v99
    %v136 = vunpack.c.l.b16 %v100
    %v137 = vunpack.c.l.b16 %v101
    %v138 = vunpack.c.l.b16 %v102
    %v139 = vunpack.c.l.b16 %v103
    %v140 = vunpack.c.l.b16 %v104
    %v141 = vunpack.c.l.b16 %v105
    %v142 = vunpack.c.l.b16 %v106
    %v143 = vunpack.c.l.b16 %v107
    %v144 = vunpack.c.l.b16 %v108
    %v145 = vunpack.c.l.b16 %v109
    %v146 = vunpack.c.l.b16 %v110
    %v147 = vunpack.c.l.b16 %v111
    %v148 = vunpack.c.l.b16 %v112
    %v149 = vunpack.c.l.b16 %v113
    %v150 = vunpack.c.l.b16 %v114
    %v151 = vpack.c.b16 %v136, %v135
    %v152 = vpack.c.b16 %v138, %v137
    %v153 = vpack.c.b16 %v140, %v139
    %v154 = vpack.c.b16 %v142, %v141
    %v155 = vpack.c.b16 %v144, %v143
    %v156 = vpack.c.b16 %v146, %v145
    %v157 = vpack.c.b16 %v148, %v147
    %v158 = vpack.c.b16 %v150, %v149
    %167 = vmatpush.bf16.msra.mxu0 %v158
    %168 = vmatpush.bf16.msra.mxu0 %v157
    %169 = vmatpush.bf16.msra.mxu0 %v156
    %170 = vmatpush.bf16.msra.mxu0 %v155
    %171 = vmatpush.bf16.msra.mxu0 %v154
    %172 = vmatpush.bf16.msra.mxu0 %v153
    %173 = vmatpush.bf16.msra.mxu0 %v152
    %174 = vmatpush.bf16.msra.mxu0 %v151
    %175 = vmatmul.bf16.gmra.mxu0 %v98
    %v176 = vpop.f32.mrf.mxu0
    %v177 = vadd.f32 %v117, %v176
    %v178 = vpop.f32.mrf.mxu0
    %179 = vdwg.mxu0
    %v180 = vmax.f32 %v177, 0.0
    %v181 = vpack.c.bf16 %v180, %v180
    %v182 = vld [vmem:[%s5] sm:$0xf]
    %v183 = vld [vmem:[%s5 + $0x4] sm:$0xf]
    %v184 = vld [vmem:[%s5 + $0x8] sm:$0xf]
    %v185 = vld [vmem:[%s5 + $0xc] sm:$0xf]
    %v186 = vld [vmem:[%s5 + $0x10] sm:$0xf]
    %v187 = vld [vmem:[%s5 + $0x14] sm:$0xf]
    %v188 = vld [vmem:[%s5 + $0x18] sm:$0xf]
    %v189 = vld [vmem:[%s5 + $0x1c] sm:$0xf]
    %v190 = vld [vmem:[%s5 + $0x20] sm:$0xf]
    %v191 = vld [vmem:[%s5 + $0x24] sm:$0xf]
    %v192 = vld [vmem:[%s5 + $0x28] sm:$0xf]
    %v193 = vld [vmem:[%s5 + $0x2c] sm:$0xf]
    %v194 = vld [vmem:[%s5 + $0x30] sm:$0xf]
    %v195 = vld [vmem:[%s5 + $0x34] sm:$0xf]
    %v196 = vld [vmem:[%s5 + $0x38] sm:$0xf]
    %v197 = vld [vmem:[%s5 + $0x3c] sm:$0xf]
    %v198 = vld [vmem:[%s6] sm:$0x1]
    %v200 = vperm.slane %v198, 0
    %v218 = vunpack.c.l.b16 %v182
    %v219 = vunpack.c.l.b16 %v183
    %v220 = vunpack.c.l.b16 %v184
    %v221 = vunpack.c.l.b16 %v185
    %v222 = vunpack.c.l.b16 %v186
    %v223 = vunpack.c.l.b16 %v187
    %v224 = vunpack.c.l.b16 %v188
    %v225 = vunpack.c.l.b16 %v189
    %v226 = vunpack.c.l.b16 %v190
    %v227 = vunpack.c.l.b16 %v191
    %v228 = vunpack.c.l.b16 %v192
    %v229 = vunpack.c.l.b16 %v193
    %v230 = vunpack.c.l.b16 %v194
    %v231 = vunpack.c.l.b16 %v195
    %v232 = vunpack.c.l.b16 %v196
    %v233 = vunpack.c.l.b16 %v197
    %v234 = vpack.c.b16 %v219, %v218
    %v235 = vpack.c.b16 %v221, %v220
    %v236 = vpack.c.b16 %v223, %v222
    %v237 = vpack.c.b16 %v225, %v224
    %v238 = vpack.c.b16 %v227, %v226
    %v239 = vpack.c.b16 %v229, %v228
    %v240 = vpack.c.b16 %v231, %v230
    %v241 = vpack.c.b16 %v233, %v232
    %250 = vmatpush.bf16.msra.mxu0 %v241
    %251 = vmatpush.bf16.msra.mxu0 %v240
    %252 = vmatpush.bf16.msra.mxu0 %v239
    %253 = vmatpush.bf16.msra.mxu0 %v238
    %254 = vmatpush.bf16.msra.mxu0 %v237
    %255 = vmatpush.bf16.msra.mxu0 %v236
    %256 = vmatpush.bf16.msra.mxu0 %v235
    %257 = vmatpush.bf16.msra.mxu0 %v234
    %258 = vmatmul.bf16.gmra.mxu0 %v181
    %v259 = vpop.f32.mrf.mxu0
    %v260 = vadd.f32 %v200, %v259
    %v261 = vpop.f32.mrf.mxu0
    %262 = vdwg.mxu0
    %vm263 = vcmask 64512
    %264 = vst.msk [vmem:[#allocation7] sm:$0xff] %vm263, %v260
    // Predicated region
    $region38: #{tpu_custom_call.1} parent=1 // pred_check
      _
    $region39: #{tpu_custom_call.1} parent=1 // pred_check_branch
      %266 = sbr.rel (0) target = $region41
    $region40: #{tpu_custom_call.1} parent=1 // pred_region
      %268 = vsyncadd [#allocation4], 0
      %s270 = sshll.u32 [#allocation7], 4
      %s271 = int_to_ptr.vmem [resolvable:$true] %s270
      %s272 = sshll.u32 %s7, 4
      %s273 = int_to_ptr.hbm [resolvable:$true] %s272
      %275 = dma.vmem_to_hbm [thread:$0]  %s271, 128, %s273, [#allocation4]
    $region41: #{tpu_custom_call.1} parent=1 // pred_fallthru
      _
    // Predicated region
    $region42: #{tpu_custom_call.1} parent=1 // pred_check
      _
    $region43: #{tpu_custom_call.1} parent=1 // pred_check_branch
      %277 = sbr.rel (0) target = $region45
    $region44: #{tpu_custom_call.1} parent=1 // pred_region
      %279 = dma.done [#allocation4], 128
    $region45: #{tpu_custom_call.1} parent=1 // pred_fallthru
      _
    %280 = vsyncpa [#allocation3], 1
    %281 = vsyncpa [#allocation6], 1
    %282 = vsyncpa [#allocation4], 1

</llo_original>
